<compile_context>
chip_gen: v6e
topology: v6e:2x2x1
jax: 0.10.0
libtpu: 0.0.40
codegen_flags: <defaults>
</compile_context>

<pallas_src>
import jax
import jax.numpy as jnp
from jax.experimental import pallas as pl
from jax.experimental.pallas import tpu as pltpu

H = 256          # hidden size (fixed by the module's LayerNorm / Linear)
EPS = 1e-12


def _fused_kernel(x_ref, r_ref, w_ref, b_ref, o_ref):
    # dropout (identity in eval) + residual add, in f32 for the reduction
    x = x_ref[...].astype(jnp.float32) + r_ref[...].astype(jnp.float32)

    # One-pass LayerNorm statistics: mean and E[x^2] reductions are
    # independent, so the two XLU reductions can overlap.
    inv_h = jnp.float32(1.0 / H)
    s1 = jnp.sum(x, axis=-1, keepdims=True)
    s2 = jnp.sum(x * x, axis=-1, keepdims=True)
    mean = s1 * inv_h
    var = s2 * inv_h - mean * mean
    xn = (x - mean) * jax.lax.rsqrt(var + EPS)

    # Fused (LN affine + Linear):  out = xn @ W' + b'
    # bf16 operands for the MXU, f32 accumulation.
    out = jnp.dot(xn.astype(jnp.bfloat16), w_ref[...],
                  preferred_element_type=jnp.float32)
    out = out + b_ref[...]
    o_ref[...] = out.astype(o_ref.dtype)


def fused_dropout_add_ln_linear(x152, x149, weight, bias, gamma, beta):
    """x152, x149: (B, S, H). weight: (H_out, H_in) torch layout. Returns (B, S, H)."""
    B, S, Hh = x152.shape
    assert Hh == H
    rows = B * S
    assert rows % 8 == 0, "row count must be a multiple of 8 (sublane tiling)"

    x2 = x152.reshape(rows, H)
    r2 = x149.reshape(rows, H)

    # Split the row axis into 2 blocks when possible: megacore sharding on
    # v7x, DMA/compute overlap on v5e/v6e.  Don't go finer (per-step overhead).
    if rows % 16 == 0:
        n_blocks = 2
    else:
        n_blocks = 1
    rows_per_block = rows // n_blocks

    # Fold the LayerNorm affine into the Linear parameters (once, off the
    # per-row hot path):
    #   y = xn * g + beta ;  out = y @ W^T + b
    #       = xn @ (g[:, None] * W^T) + (beta @ W^T + b)
    w_f32 = weight.T.astype(jnp.float32)                       # (H_in, H_out)
    w_fused = (gamma.astype(jnp.float32)[:, None] * w_f32).astype(jnp.bfloat16)
    b_fused = (beta.astype(jnp.float32) @ w_f32
               + bias.astype(jnp.float32)).reshape(1, H)       # keep f32 bias

    cost = pl.CostEstimate(
        flops=2 * rows * H * H,
        transcendentals=0,
        bytes_accessed=3 * rows * H * 4 + H * H * 2 + H * 4,
    )

    out = pl.pallas_call(
        _fused_kernel,
        out_shape=jax.ShapeDtypeStruct((rows, H), x152.dtype),
        grid_spec=pltpu.PrefetchScalarGridSpec(
            num_scalar_prefetch=0,
            grid=(n_blocks,),
            in_specs=[
                pl.BlockSpec((rows_per_block, H), lambda i: (i, 0)),  # x152
                pl.BlockSpec((rows_per_block, H), lambda i: (i, 0)),  # x149
                pl.BlockSpec((H, H), lambda i: (0, 0)),   # fused W (resident)
                pl.BlockSpec((1, H), lambda i: (0, 0)),   # fused bias (resident)
            ],
            out_specs=pl.BlockSpec((rows_per_block, H), lambda i: (i, 0)),
        ),
        compiler_params=pltpu.CompilerParams(
            dimension_semantics=("parallel",)),
        cost_estimate=cost,
    )(x2, r2, w_fused, b_fused)

    return out.reshape(B, S, H)


def _reference(x152, x149, weight, bias, gamma, beta):
    x = x152.astype(jnp.float32) + x149.astype(jnp.float32)
    mean = jnp.mean(x, axis=-1, keepdims=True)
    var = jnp.mean((x - mean) ** 2, axis=-1, keepdims=True)
    xn = (x - mean) / jnp.sqrt(var + EPS)
    y = xn * gamma + beta
    return y @ weight.T + bias


if __name__ == "__main__":
    key = jax.random.PRNGKey(0)
    k1, k2, k3, k4 = jax.random.split(key, 4)

    B, S = 1, 384  # matches the module's input shape (1, 384, 256)
    x152 = jax.random.normal(k1, (B, S, H), dtype=jnp.float32)
    x149 = jax.random.normal(k2, (B, S, H), dtype=jnp.float32)

    # Deterministic parameter init (shapes from the module's __init__)
    weight = jax.random.normal(k3, (H, H), dtype=jnp.float32) * 0.02   # Linear weight (out, in)
    bias = jax.random.normal(k4, (H,), dtype=jnp.float32) * 0.02       # Linear bias
    gamma = jnp.ones((H,), dtype=jnp.float32)                          # LayerNorm weight
    beta = jnp.zeros((H,), dtype=jnp.float32)                          # LayerNorm bias

    out = fused_dropout_add_ln_linear(x152, x149, weight, bias, gamma, beta)
    out = jax.block_until_ready(out)

    ref = _reference(x152, x149, weight, bias, gamma, beta)
    assert out.shape == (B, S, H)
    # bf16 MXU operands -> relaxed tolerance (f32 accumulation keeps error ~1e-3)
    assert jnp.allclose(out, ref, atol=2e-2, rtol=2e-2), "mismatch vs reference"

    print("KERNEL_OK")
</pallas_src>

<mosaic_0001>
module attributes {stable_mosaic.version = 11 : i64} {
  func.func @_fused_kernel(%arg0: i32, %arg1: memref<192x256xf32, #tpu.memory_space<vmem>>, %arg2: memref<192x256xf32, #tpu.memory_space<vmem>>, %arg3: memref<256x256xbf16, #tpu.memory_space<vmem>>, %arg4: memref<1x256xf32, #tpu.memory_space<vmem>>, %arg5: memref<192x256xf32, #tpu.memory_space<vmem>>) attributes {dimension_semantics = [#tpu.dimension_semantics<parallel>], iteration_bounds = array<i64: 2>, scalar_prefetch = 0 : i64, scratch_operands = 0 : i64, tpu.core_type = #tpu.core_type<tc>, window_params = [{transform_indices = @transform_0, window_bounds = array<i64: 192, 256>}, {transform_indices = @transform_1, window_bounds = array<i64: 192, 256>}, {pipeline_mode = #tpu.pipeline_mode<synchronous>, transform_indices = @transform_2, window_bounds = array<i64: 256, 256>}, {pipeline_mode = #tpu.pipeline_mode<synchronous>, transform_indices = @transform_3, window_bounds = array<i64: 1, 256>}, {transform_indices = @transform_4, window_bounds = array<i64: 192, 256>}]} {
    %c0 = arith.constant 0 : index
    %c0_0 = arith.constant 0 : index
    %0 = vector.load %arg1[%c0, %c0_0] : memref<192x256xf32, #tpu.memory_space<vmem>>, vector<192x256xf32>
    %c0_1 = arith.constant 0 : index
    %c0_2 = arith.constant 0 : index
    %1 = vector.load %arg2[%c0_1, %c0_2] : memref<192x256xf32, #tpu.memory_space<vmem>>, vector<192x256xf32>
    %2 = arith.addf %0, %1 : vector<192x256xf32>
    %cst = arith.constant dense<0.000000e+00> : vector<192xf32>
    %3 = vector.multi_reduction <add>, %2, %cst [1] : vector<192x256xf32> to vector<192xf32>
    %4 = vector.shape_cast %3 : vector<192xf32> to vector<192x1xf32>
    %5 = arith.mulf %2, %2 : vector<192x256xf32>
    %cst_3 = arith.constant dense<0.000000e+00> : vector<192xf32>
    %6 = vector.multi_reduction <add>, %5, %cst_3 [1] : vector<192x256xf32> to vector<192xf32>
    %7 = vector.shape_cast %6 : vector<192xf32> to vector<192x1xf32>
    %cst_4 = arith.constant 3.906250e-03 : f32
    %8 = vector.broadcast %cst_4 : f32 to vector<192x1xf32>
    %9 = arith.mulf %4, %8 : vector<192x1xf32>
    %cst_5 = arith.constant 3.906250e-03 : f32
    %10 = vector.broadcast %cst_5 : f32 to vector<192x1xf32>
    %11 = arith.mulf %7, %10 : vector<192x1xf32>
    %12 = arith.mulf %9, %9 : vector<192x1xf32>
    %13 = arith.subf %11, %12 : vector<192x1xf32>
    %14 = vector.broadcast %9 : vector<192x1xf32> to vector<192x256xf32>
    %15 = arith.subf %2, %14 : vector<192x256xf32>
    %cst_6 = arith.constant 9.99999996E-13 : f32
    %16 = vector.broadcast %cst_6 : f32 to vector<192x1xf32>
    %17 = arith.addf %13, %16 : vector<192x1xf32>
    %18 = math.rsqrt %17 : vector<192x1xf32>
    %19 = vector.broadcast %18 : vector<192x1xf32> to vector<192x256xf32>
    %20 = arith.mulf %15, %19 : vector<192x256xf32>
    %21 = arith.truncf %20 : vector<192x256xf32> to vector<192x256xbf16>
    %c0_7 = arith.constant 0 : index
    %c0_8 = arith.constant 0 : index
    %22 = vector.load %arg3[%c0_7, %c0_8] : memref<256x256xbf16, #tpu.memory_space<vmem>>, vector<256x256xbf16>
    %cst_9 = arith.constant dense<0.000000e+00> : vector<192x256xf32>
    %23 = tpu.matmul %21, %22, %cst_9 {dimension_numbers = #tpu.dot_dimension_numbers<[1], [0], [0], [1], [0, 0, 1, 1], [], []>} : vector<192x256xbf16>, vector<256x256xbf16>, vector<192x256xf32> -> vector<192x256xf32>
    %c0_10 = arith.constant 0 : index
    %c0_11 = arith.constant 0 : index
    %24 = vector.load %arg4[%c0_10, %c0_11] : memref<1x256xf32, #tpu.memory_space<vmem>>, vector<1x256xf32>
    %25 = vector.broadcast %24 : vector<1x256xf32> to vector<192x256xf32>
    %26 = arith.addf %23, %25 : vector<192x256xf32>
    %c0_12 = arith.constant 0 : index
    %c0_13 = arith.constant 0 : index
    %27 = vector.load %arg5[%c0_12, %c0_13] : memref<192x256xf32, #tpu.memory_space<vmem>>, vector<192x256xf32>
    tpu.vector_store %arg5[%c0_12, %c0_13], %26 {strides = array<i32>} : memref<192x256xf32, #tpu.memory_space<vmem>>, vector<192x256xf32>,
    return
  }
  func.func @transform_0(%arg0: i32) -> (i32, i32) {
    %c0_i32 = arith.constant 0 : i32
    %c0_i32_0 = arith.constant 0 : i32
    return %arg0, %c0_i32 : i32, i32
  }
  func.func @transform_1(%arg0: i32) -> (i32, i32) {
    %c0_i32 = arith.constant 0 : i32
    %c0_i32_0 = arith.constant 0 : i32
    return %arg0, %c0_i32 : i32, i32
  }
  func.func @transform_2(%arg0: i32) -> (i32, i32) {
    %c0_i32 = arith.constant 0 : i32
    %c0_i32_0 = arith.constant 0 : i32
    %c0_i32_1 = arith.constant 0 : i32
    return %c0_i32, %c0_i32_0 : i32, i32
  }
  func.func @transform_3(%arg0: i32) -> (i32, i32) {
    %c0_i32 = arith.constant 0 : i32
    %c0_i32_0 = arith.constant 0 : i32
    %c0_i32_1 = arith.constant 0 : i32
    return %c0_i32, %c0_i32_0 : i32, i32
  }
  func.func @transform_4(%arg0: i32) -> (i32, i32) {
    %c0_i32 = arith.constant 0 : i32
    %c0_i32_0 = arith.constant 0 : i32
    return %arg0, %c0_i32 : i32, i32
  }
}

</mosaic_0001>

<llo_original>
// kernel: tpu_custom_call.1
$region0: #{tpu_custom_call.1}
  #allocation0 [shape = 'u32[]', space=smem, size = 0x4, offset = 0x4, fixed_abs, tag = 'smem constant byte address 0x4 - core index']
  #allocation1 [shape = 'u32[144,128]{1,0:T(1,128)}', space=vmem, size = 0x12000, scoped, tag = 'internal scratch']
  %s0 = inlined_call_operand.hbm [shape: f32[384,256], index: 0, kind: input, shape index: {}]
  %s1 = inlined_call_operand.hbm [shape: f32[384,256], index: 1, kind: input, shape index: {}]
  %s2 = inlined_call_operand.hbm [shape: bf16[256,256], index: 2, kind: input, shape index: {}]
  %s3 = inlined_call_operand.vmem [shape: f32[1,256], index: 3, kind: input, shape index: {}]
  %s4 = inlined_call_operand.hbm [shape: f32[384,256], index: 4, kind: output, shape index: {}]
  %s5 = sld [smem:[#allocation0]]
  $region61: #{tpu_custom_call.1} parent=0
    _
  %s7 = ssub.s32 1, %s5
  %s8 = scalar_select 0, %s7, %s5
  $region1: #{tpu_custom_call.1} parent=0
    #allocation2 [shape = 'u8[393216]{0}', space=vmem, size = 0x60000, scoped, tag = 'input window, operand 0']
    #allocation3 [shape = 's32[2]{0}', space=sflag, size = 0x8, scoped, tag = 'scoped memory for tpu_custom_call.1']
    #allocation4 [shape = 's32[2]{0}', space=sflag, size = 0x8, scoped, tag = 'scoped memory for tpu_custom_call.1']
    #allocation5 [shape = 'u8[393216]{0}', space=vmem, size = 0x60000, scoped, tag = 'input window, operand 1']
    #allocation6 [shape = 's32[2]{0}', space=sflag, size = 0x8, scoped, tag = 'scoped memory for tpu_custom_call.1']
    #allocation7 [shape = 'u8[131072]{0}', space=vmem, size = 0x20000, scoped, tag = 'input window, operand 2, single buffered']
    #allocation8 [shape = 'u8[393216]{0}', space=vmem, size = 0x60000, scoped, tag = 'output window, operand 0']
    %9 = vsyncpa [#allocation3], 0
    %s10 = scalar_lea.sflag [#allocation3], 1
    %11 = vsyncpa %s10, 0
    %12 = vsyncpa [#allocation6], 0
    %s13 = scalar_lea.sflag [#allocation6], 1
    %14 = vsyncpa %s13, 0
    %15 = vsyncpa [#allocation4], 0
    %s16 = scalar_lea.sflag [#allocation4], 1
    %17 = vsyncpa %s16, 0
    loop: start=0, step=1, limit=4
    $region2: #{tpu_custom_call.1} parent=1 // loop_pre_header
      _
    $region3: #{tpu_custom_call.1} parent=1 // loop_header
      %s19 = sphi 0, %s23
      %p20 = scmp.ge.s32.totalorder %s19, 4
      %s29 = sphi 0, %s31
      %s32 = sphi 0, %s29
      %s33 = sphi 0, %s32
      %s49 = sphi 0, %s33
      %s55 = sphi 0, %s57
      %s58 = sphi 0, %s55
      %s59 = sphi 0, %s58
      %s75 = sphi 0, %s59
      %s79 = sphi 0, %s79
      %s81 = sphi 0, %s79
      %s82 = sphi 0, %s81
      %s96 = sphi 0, %s82
      %s100 = sphi 0, %s100
      %s102 = sphi 0, %s100
      %s103 = sphi 0, %s102
      %s117 = sphi 0, %s103
      %s123 = sphi 0, %s125
      %s126 = sphi 0, %s123
      %s127 = sphi 0, %s126
      %s143 = sphi 0, %s127
    $region4: #{tpu_custom_call.1} parent=1 // loop_header_branch
      %22 = sbr.rel (%p20) target = $region8
    $region5: #{tpu_custom_call.1} parent=1 // loop_body
      %s24 = ssub.s32 %s19, 1
      %s25 = ssub.s32 %s19, 2
      %s26 = sadd.s32 %s19, 1
      %s27 = ssub.s32 %s19, %s26
      %p28 = scmp.eq.s32.totalorder %s27, 0
      %s30 = sadd.s32 %s29, 1
      %s31 = scalar_select %p28, %s29, %s30
      %p34 = pneg %p28
      %p35 = scmp.eq.s32.totalorder %s19, 1
      %p36 = por %p34, %p35
      %p37 = scmp.ne.s32.totalorder %s29, %s32
      %p38 = scmp.eq.s32.totalorder %s19, 0
      %p39 = por %p37, %p38
      %p40 = scmp.ne.s32.totalorder %s29, %s32
      %p41 = scmp.eq.s32.totalorder %s24, 1
      %p42 = por %p40, %p41
      %p43 = scmp.ne.s32.totalorder %s32, %s33
      %p44 = scmp.eq.s32.totalorder %s24, 0
      %p45 = por %p43, %p44
      %p46 = scmp.ne.s32.totalorder %s32, %s33
      %p47 = scmp.eq.s32.totalorder %s25, 1
      %p48 = por %p46, %p47
      %p50 = scmp.ne.s32.totalorder %s33, %s49
      %p51 = scmp.eq.s32.totalorder %s25, 0
      %p52 = por %p50, %p51
      %s53 = ssub.s32 %s19, %s26
      %p54 = scmp.eq.s32.totalorder %s53, 0
      %s56 = sadd.s32 %s55, 1
      %s57 = scalar_select %p54, %s55, %s56
      %p60 = pneg %p54
      %p61 = scmp.eq.s32.totalorder %s19, 1
      %p62 = por %p60, %p61
      %p63 = scmp.ne.s32.totalorder %s55, %s58
      %p64 = scmp.eq.s32.totalorder %s19, 0
      %p65 = por %p63, %p64
      %p66 = scmp.ne.s32.totalorder %s55, %s58
      %p67 = scmp.eq.s32.totalorder %s24, 1
      %p68 = por %p66, %p67
      %p69 = scmp.ne.s32.totalorder %s58, %s59
      %p70 = scmp.eq.s32.totalorder %s24, 0
      %p71 = por %p69, %p70
      %p72 = scmp.ne.s32.totalorder %s58, %s59
      %p73 = scmp.eq.s32.totalorder %s25, 1
      %p74 = por %p72, %p73
      %p76 = scmp.ne.s32.totalorder %s59, %s75
      %p77 = scmp.eq.s32.totalorder %s25, 0
      %p78 = por %p76, %p77
      %s80 = sadd.s32 %s79, 1
      %p83 = scmp.eq.s32.totalorder %s19, 1
      %p84 = scmp.ne.s32.totalorder %s79, %s81
      %p85 = scmp.eq.s32.totalorder %s19, 0
      %p86 = por %p84, %p85
      %p87 = scmp.ne.s32.totalorder %s79, %s81
      %p88 = scmp.eq.s32.totalorder %s24, 1
      %p89 = por %p87, %p88
      %p90 = scmp.ne.s32.totalorder %s81, %s82
      %p91 = scmp.eq.s32.totalorder %s24, 0
      %p92 = por %p90, %p91
      %p93 = scmp.ne.s32.totalorder %s81, %s82
      %p94 = scmp.eq.s32.totalorder %s25, 1
      %p95 = por %p93, %p94
      %p97 = scmp.ne.s32.totalorder %s82, %s96
      %p98 = scmp.eq.s32.totalorder %s25, 0
      %p99 = por %p97, %p98
      %s101 = sadd.s32 %s100, 1
      %p104 = scmp.eq.s32.totalorder %s19, 1
      %p105 = scmp.ne.s32.totalorder %s100, %s102
      %p106 = scmp.eq.s32.totalorder %s19, 0
      %p107 = por %p105, %p106
      %p108 = scmp.ne.s32.totalorder %s100, %s102
      %p109 = scmp.eq.s32.totalorder %s24, 1
      %p110 = por %p108, %p109
      %p111 = scmp.ne.s32.totalorder %s102, %s103
      %p112 = scmp.eq.s32.totalorder %s24, 0
      %p113 = por %p111, %p112
      %p114 = scmp.ne.s32.totalorder %s102, %s103
      %p115 = scmp.eq.s32.totalorder %s25, 1
      %p116 = por %p114, %p115
      %p118 = scmp.ne.s32.totalorder %s103, %s117
      %p119 = scmp.eq.s32.totalorder %s25, 0
      %p120 = por %p118, %p119
      %s121 = ssub.s32 %s19, %s26
      %p122 = scmp.eq.s32.totalorder %s121, 0
      %s124 = sadd.s32 %s123, 1
      %s125 = scalar_select %p122, %s123, %s124
      %p128 = pneg %p122
      %p129 = scmp.eq.s32.totalorder %s19, 1
      %p130 = por %p128, %p129
      %p131 = scmp.ne.s32.totalorder %s123, %s126
      %p132 = scmp.eq.s32.totalorder %s19, 0
      %p133 = por %p131, %p132
      %p134 = scmp.ne.s32.totalorder %s123, %s126
      %p135 = scmp.eq.s32.totalorder %s24, 1
      %p136 = por %p134, %p135
      %p137 = scmp.ne.s32.totalorder %s126, %s127
      %p138 = scmp.eq.s32.totalorder %s24, 0
      %p139 = por %p137, %p138
      %p140 = scmp.ne.s32.totalorder %s126, %s127
      %p141 = scmp.eq.s32.totalorder %s25, 1
      %p142 = por %p140, %p141
      %p144 = scmp.ne.s32.totalorder %s127, %s143
      %p145 = scmp.eq.s32.totalorder %s25, 0
      %p146 = por %p144, %p145
      %p147 = scmp.le.s32.totalorder 1, %s19
      %p148 = scmp.lt.s32.totalorder %s19, 3
      %p149 = pnand %p147, %p148
      %p150 = pneg %p149
      // Predicated region
      $region9: #{tpu_custom_call.1} parent=5 // pred_check
        _
      $region10: #{tpu_custom_call.1} parent=5 // pred_check_branch
        %152 = sbr.rel (%p149) target = $region12
      $region11: #{tpu_custom_call.1} parent=5 // pred_region
        %s153 = ssub.s32 %s19, 1
        // Predicated region
        $region13: #{tpu_custom_call.1} parent=11 // pred_check
          %p154 = pneg %p92
        $region14: #{tpu_custom_call.1} parent=11 // pred_check_branch
          %156 = sbr.rel (%p154) target = $region16
        $region15: #{tpu_custom_call.1} parent=11 // pred_region
          %s158 = ssub.s32 4096, 4096
          %159 = vsyncadd [#allocation6], %s158
          %s160 = sshll.u32 [#allocation7], 4
          %s161 = int_to_ptr.vmem [resolvable:$true] %s160
          %166 = dma.hbm_to_vmem [thread:$0]  %s2, 4096, %s161, [#allocation6], 128, 128, 8
        $region16: #{tpu_custom_call.1} parent=11 // pred_fallthru
          _
        // Predicated region
        $region17: #{tpu_custom_call.1} parent=11 // pred_check
          %p167 = pneg %p113
        $region18: #{tpu_custom_call.1} parent=11 // pred_check_branch
          %169 = sbr.rel (%p167) target = $region20
        $region19: #{tpu_custom_call.1} parent=11 // pred_region
          _
        $region20: #{tpu_custom_call.1} parent=11 // pred_fallthru
          _
      $region12: #{tpu_custom_call.1} parent=5 // pred_fallthru
        _
      %p170 = scmp.lt.s32.totalorder %s19, 2
      // Predicated region
      $region21: #{tpu_custom_call.1} parent=5 // pred_check
        %p171 = pneg %p170
      $region22: #{tpu_custom_call.1} parent=5 // pred_check_branch
        %173 = sbr.rel (%p171) target = $region24
      $region23: #{tpu_custom_call.1} parent=5 // pred_region
        // Predicated region
        $region25: #{tpu_custom_call.1} parent=23 // pred_check
          %p174 = pneg %p39
        $region26: #{tpu_custom_call.1} parent=23 // pred_check_branch
          %176 = sbr.rel (%p174) target = $region28
        $region27: #{tpu_custom_call.1} parent=23 // pred_region
          %s177 = sand.u32 %s29, 1
          %s178 = scalar_lea.sflag [#allocation3], %s177
          %s179 = sand.u32 %s29, 1
          %s180 = smul.addr %s179, 384
          %s181 = scalar_lea.vmem [#allocation2], %s180
          %s182 = smul.u32 24, %s19
          %s184 = ssub.s32 6144, 6144
          %185 = vsyncadd %s178, %s184
          %s186 = smul.addr %s182, 2
          %s187 = smul.addr %s186, 128
          %s188 = scalar_lea.hbm %s0, %s187
          %s189 = sshll.u32 %s181, 4
          %s190 = int_to_ptr.vmem [resolvable:$true] %s189
          %195 = dma.hbm_to_vmem [thread:$0]  %s188, 6144, %s190, %s178, 256, 256, 16
        $region28: #{tpu_custom_call.1} parent=23 // pred_fallthru
          _
        // Predicated region
        $region29: #{tpu_custom_call.1} parent=23 // pred_check
          %p196 = pneg %p65
        $region30: #{tpu_custom_call.1} parent=23 // pred_check_branch
          %198 = sbr.rel (%p196) target = $region32
        $region31: #{tpu_custom_call.1} parent=23 // pred_region
          %s199 = sand.u32 %s19, 1
          %s200 = scalar_lea.sflag [#allocation6], %s199
          %s201 = sand.u32 %s55, 1
          %s202 = smul.addr %s201, 384
          %s203 = scalar_lea.vmem [#allocation5], %s202
          %s204 = smul.u32 24, %s19
          %s206 = ssub.s32 6144, 6144
          %207 = vsyncadd %s200, %s206
          %s208 = smul.addr %s204, 2
          %s209 = smul.addr %s208, 128
          %s210 = scalar_lea.hbm %s1, %s209
          %s211 = sshll.u32 %s203, 4
          %s212 = int_to_ptr.vmem [resolvable:$true] %s211
          %217 = dma.hbm_to_vmem [thread:$0]  %s210, 6144, %s212, %s200, 256, 256, 16
        $region32: #{tpu_custom_call.1} parent=23 // pred_fallthru
          _
      $region24: #{tpu_custom_call.1} parent=5 // pred_fallthru
        _
      %p218 = scmp.le.s32.totalorder 1, %s19
      %p219 = scmp.lt.s32.totalorder %s19, 3
      %p220 = pnand %p218, %p219
      %p221 = pneg %p220
      // Predicated region
      $region33: #{tpu_custom_call.1} parent=5 // pred_check
        _
      $region34: #{tpu_custom_call.1} parent=5 // pred_check_branch
        %223 = sbr.rel (%p220) target = $region36
      $region35: #{tpu_custom_call.1} parent=5 // pred_region
        %s224 = ssub.s32 %s19, 1
        %s225 = sand.u32 %s32, 1
        %s226 = scalar_lea.sflag [#allocation3], %s225
        %s227 = sand.u32 %s32, 1
        %s228 = smul.addr %s227, 384
        %s229 = scalar_lea.vmem [#allocation2], %s228
        // Predicated region
        $region37: #{tpu_custom_call.1} parent=35 // pred_check
          %p230 = pneg %p45
        $region38: #{tpu_custom_call.1} parent=35 // pred_check_branch
          %232 = sbr.rel (%p230) target = $region40
        $region39: #{tpu_custom_call.1} parent=35 // pred_region
          %233 = dma.done %s226, 6144
        $region40: #{tpu_custom_call.1} parent=35 // pred_fallthru
          _
        %s234 = sand.u32 %s24, 1
        %s235 = scalar_lea.sflag [#allocation6], %s234
        %s236 = sand.u32 %s58, 1
        %s237 = smul.addr %s236, 384
        %s238 = scalar_lea.vmem [#allocation5], %s237
        // Predicated region
        $region41: #{tpu_custom_call.1} parent=35 // pred_check
          %p239 = pneg %p71
        $region42: #{tpu_custom_call.1} parent=35 // pred_check_branch
          %241 = sbr.rel (%p239) target = $region44
        $region43: #{tpu_custom_call.1} parent=35 // pred_region
          %242 = dma.done %s235, 6144
        $region44: #{tpu_custom_call.1} parent=35 // pred_fallthru
          _
        // Predicated region
        $region45: #{tpu_custom_call.1} parent=35 // pred_check
          %p243 = pneg %p92
        $region46: #{tpu_custom_call.1} parent=35 // pred_check_branch
          %245 = sbr.rel (%p243) target = $region48
        $region47: #{tpu_custom_call.1} parent=35 // pred_region
          %246 = dma.done [#allocation6], 4096
        $region48: #{tpu_custom_call.1} parent=35 // pred_fallthru
          _
        %s247 = sand.u32 %s32, 1
        %s248 = scalar_lea.sflag [#allocation3], %s247
        %s249 = sand.u32 %s32, 1
        %s250 = smul.addr %s249, 384
        %s251 = scalar_lea.vmem [#allocation2], %s250
        %p252 = pneg %p45
        %p253 = pneg %p42
        %s254 = sand.u32 %s24, 1
        %s255 = scalar_lea.sflag [#allocation6], %s254
        %s256 = sand.u32 %s58, 1
        %s257 = smul.addr %s256, 384
        %s258 = scalar_lea.vmem [#allocation5], %s257
        %p259 = pneg %p71
        %p260 = pneg %p68
        %p261 = pneg %p92
        %p262 = pneg %p89
        %p263 = pneg %p113
        %p264 = pneg %p110
        %p265 = pneg %p139
        %p266 = pneg %p136
        %s267 = sand.u32 %s126, 1
        %s268 = scalar_lea.sflag [#allocation4], %s267
        %s269 = sand.u32 %s126, 1
        %s270 = smul.addr %s269, 384
        %s271 = scalar_lea.vmem [#allocation8], %s270
        %s272 = smul.u32 24, %s24
        %s273 = smul.u32 24, %s24
        %s274 = smul.u32 24, %s24
        %v275 = vld [vmem:[%s229] sm:$0xff]
        %v276 = vld [vmem:[%s229 + $0x8] sm:$0xff]
        %v277 = vld [vmem:[%s229 + $0x10] sm:$0xff]
        %v278 = vld [vmem:[%s229 + $0x18] sm:$0xff]
        %v279 = vld [vmem:[%s229 + $0x20] sm:$0xff]
        %v280 = vld [vmem:[%s229 + $0x28] sm:$0xff]
        %v281 = vld [vmem:[%s229 + $0x30] sm:$0xff]
        %v282 = vld [vmem:[%s229 + $0x38] sm:$0xff]
        %v283 = vld [vmem:[%s229 + $0x40] sm:$0xff]
        %v284 = vld [vmem:[%s229 + $0x48] sm:$0xff]
        %v285 = vld [vmem:[%s229 + $0x50] sm:$0xff]
        %v286 = vld [vmem:[%s229 + $0x58] sm:$0xff]
        %v287 = vld [vmem:[%s229 + $0x60] sm:$0xff]
        %v288 = vld [vmem:[%s229 + $0x68] sm:$0xff]
        %v289 = vld [vmem:[%s229 + $0x70] sm:$0xff]
        %v290 = vld [vmem:[%s229 + $0x78] sm:$0xff]
        %v291 = vld [vmem:[%s229 + $0x80] sm:$0xff]
        %v292 = vld [vmem:[%s229 + $0x88] sm:$0xff]
        %v293 = vld [vmem:[%s229 + $0x90] sm:$0xff]
        %v294 = vld [vmem:[%s229 + $0x98] sm:$0xff]
        %v295 = vld [vmem:[%s229 + $0xa0] sm:$0xff]
        %v296 = vld [vmem:[%s229 + $0xa8] sm:$0xff]
        %v297 = vld [vmem:[%s229 + $0xb0] sm:$0xff]
        %v298 = vld [vmem:[%s229 + $0xb8] sm:$0xff]
        %v299 = vld [vmem:[%s229 + $0xc0] sm:$0xff]
        %v300 = vld [vmem:[%s229 + $0xc8] sm:$0xff]
        %v301 = vld [vmem:[%s229 + $0xd0] sm:$0xff]
        %v302 = vld [vmem:[%s229 + $0xd8] sm:$0xff]
        %v303 = vld [vmem:[%s229 + $0xe0] sm:$0xff]
        %v304 = vld [vmem:[%s229 + $0xe8] sm:$0xff]
        %v305 = vld [vmem:[%s229 + $0xf0] sm:$0xff]
        %v306 = vld [vmem:[%s229 + $0xf8] sm:$0xff]
        %v307 = vld [vmem:[%s229 + $0x100] sm:$0xff]
        %v308 = vld [vmem:[%s229 + $0x108] sm:$0xff]
        %v309 = vld [vmem:[%s229 + $0x110] sm:$0xff]
        %v310 = vld [vmem:[%s229 + $0x118] sm:$0xff]
        %v311 = vld [vmem:[%s229 + $0x120] sm:$0xff]
        %v312 = vld [vmem:[%s229 + $0x128] sm:$0xff]
        %v313 = vld [vmem:[%s229 + $0x130] sm:$0xff]
        %v314 = vld [vmem:[%s229 + $0x138] sm:$0xff]
        %v315 = vld [vmem:[%s229 + $0x140] sm:$0xff]
        %v316 = vld [vmem:[%s229 + $0x148] sm:$0xff]
        %v317 = vld [vmem:[%s229 + $0x150] sm:$0xff]
        %v318 = vld [vmem:[%s229 + $0x158] sm:$0xff]
        %v319 = vld [vmem:[%s229 + $0x160] sm:$0xff]
        %v320 = vld [vmem:[%s229 + $0x168] sm:$0xff]
        %v321 = vld [vmem:[%s229 + $0x170] sm:$0xff]
        %v322 = vld [vmem:[%s229 + $0x178] sm:$0xff]
        %v323 = vld [vmem:[%s238] sm:$0xff]
        %v324 = vld [vmem:[%s238 + $0x8] sm:$0xff]
        %v325 = vld [vmem:[%s238 + $0x10] sm:$0xff]
        %v326 = vld [vmem:[%s238 + $0x18] sm:$0xff]
        %v327 = vld [vmem:[%s238 + $0x20] sm:$0xff]
        %v328 = vld [vmem:[%s238 + $0x28] sm:$0xff]
        %v329 = vld [vmem:[%s238 + $0x30] sm:$0xff]
        %v330 = vld [vmem:[%s238 + $0x38] sm:$0xff]
        %v331 = vld [vmem:[%s238 + $0x40] sm:$0xff]
        %v332 = vld [vmem:[%s238 + $0x48] sm:$0xff]
        %v333 = vld [vmem:[%s238 + $0x50] sm:$0xff]
        %v334 = vld [vmem:[%s238 + $0x58] sm:$0xff]
        %v335 = vld [vmem:[%s238 + $0x60] sm:$0xff]
        %v336 = vld [vmem:[%s238 + $0x68] sm:$0xff]
        %v337 = vld [vmem:[%s238 + $0x70] sm:$0xff]
        %v338 = vld [vmem:[%s238 + $0x78] sm:$0xff]
        %v339 = vld [vmem:[%s238 + $0x80] sm:$0xff]
        %v340 = vld [vmem:[%s238 + $0x88] sm:$0xff]
        %v341 = vld [vmem:[%s238 + $0x90] sm:$0xff]
        %v342 = vld [vmem:[%s238 + $0x98] sm:$0xff]
        %v343 = vld [vmem:[%s238 + $0xa0] sm:$0xff]
        %v344 = vld [vmem:[%s238 + $0xa8] sm:$0xff]
        %v345 = vld [vmem:[%s238 + $0xb0] sm:$0xff]
        %v346 = vld [vmem:[%s238 + $0xb8] sm:$0xff]
        %v347 = vld [vmem:[%s238 + $0xc0] sm:$0xff]
        %v348 = vld [vmem:[%s238 + $0xc8] sm:$0xff]
        %v349 = vld [vmem:[%s238 + $0xd0] sm:$0xff]
        %v350 = vld [vmem:[%s238 + $0xd8] sm:$0xff]
        %v351 = vld [vmem:[%s238 + $0xe0] sm:$0xff]
        %v352 = vld [vmem:[%s238 + $0xe8] sm:$0xff]
        %v353 = vld [vmem:[%s238 + $0xf0] sm:$0xff]
        %v354 = vld [vmem:[%s238 + $0xf8] sm:$0xff]
        %v355 = vld [vmem:[%s238 + $0x100] sm:$0xff]
        %v356 = vld [vmem:[%s238 + $0x108] sm:$0xff]
        %v357 = vld [vmem:[%s238 + $0x110] sm:$0xff]
        %v358 = vld [vmem:[%s238 + $0x118] sm:$0xff]
        %v359 = vld [vmem:[%s238 + $0x120] sm:$0xff]
        %v360 = vld [vmem:[%s238 + $0x128] sm:$0xff]
        %v361 = vld [vmem:[%s238 + $0x130] sm:$0xff]
        %v362 = vld [vmem:[%s238 + $0x138] sm:$0xff]
        %v363 = vld [vmem:[%s238 + $0x140] sm:$0xff]
        %v364 = vld [vmem:[%s238 + $0x148] sm:$0xff]
        %v365 = vld [vmem:[%s238 + $0x150] sm:$0xff]
        %v366 = vld [vmem:[%s238 + $0x158] sm:$0xff]
        %v367 = vld [vmem:[%s238 + $0x160] sm:$0xff]
        %v368 = vld [vmem:[%s238 + $0x168] sm:$0xff]
        %v369 = vld [vmem:[%s238 + $0x170] sm:$0xff]
        %v370 = vld [vmem:[%s238 + $0x178] sm:$0xff]
        %v371 = vadd.f32 %v275, %v323
        %v372 = vadd.f32 %v276, %v324
        %v373 = vadd.f32 %v277, %v325
        %v374 = vadd.f32 %v278, %v326
        %v375 = vadd.f32 %v279, %v327
        %v376 = vadd.f32 %v280, %v328
        %v377 = vadd.f32 %v281, %v329
        %v378 = vadd.f32 %v282, %v330
        %v379 = vadd.f32 %v283, %v331
        %v380 = vadd.f32 %v284, %v332
        %v381 = vadd.f32 %v285, %v333
        %v382 = vadd.f32 %v286, %v334
        %v383 = vadd.f32 %v287, %v335
        %v384 = vadd.f32 %v288, %v336
        %v385 = vadd.f32 %v289, %v337
        %v386 = vadd.f32 %v290, %v338
        %v387 = vadd.f32 %v291, %v339
        %v388 = vadd.f32 %v292, %v340
        %v389 = vadd.f32 %v293, %v341
        %v390 = vadd.f32 %v294, %v342
        %v391 = vadd.f32 %v295, %v343
        %v392 = vadd.f32 %v296, %v344
        %v393 = vadd.f32 %v297, %v345
        %v394 = vadd.f32 %v298, %v346
        %v395 = vadd.f32 %v299, %v347
        %v396 = vadd.f32 %v300, %v348
        %v397 = vadd.f32 %v301, %v349
        %v398 = vadd.f32 %v302, %v350
        %v399 = vadd.f32 %v303, %v351
        %v400 = vadd.f32 %v304, %v352
        %v401 = vadd.f32 %v305, %v353
        %v402 = vadd.f32 %v306, %v354
        %v403 = vadd.f32 %v307, %v355
        %v404 = vadd.f32 %v308, %v356
        %v405 = vadd.f32 %v309, %v357
        %v406 = vadd.f32 %v310, %v358
        %v407 = vadd.f32 %v311, %v359
        %v408 = vadd.f32 %v312, %v360
        %v409 = vadd.f32 %v313, %v361
        %v410 = vadd.f32 %v314, %v362
        %v411 = vadd.f32 %v315, %v363
        %v412 = vadd.f32 %v316, %v364
        %v413 = vadd.f32 %v317, %v365
        %v414 = vadd.f32 %v318, %v366
        %v415 = vadd.f32 %v319, %v367
        %v416 = vadd.f32 %v320, %v368
        %v417 = vadd.f32 %v321, %v369
        %v418 = vadd.f32 %v322, %v370
        %v419 = vadd.f32 %v371, %v372
        %420 = vadd.xlane.f32.xlu0 %v419
        %v421 = vpop.xlane.xlu0 %420
        %v422 = vadd.f32 %v373, %v374
        %423 = vadd.xlane.f32.xlu0 %v422
        %v424 = vpop.xlane.xlu0 %423
        %v425 = vadd.f32 %v375, %v376
        %426 = vadd.xlane.f32.xlu0 %v425
        %v427 = vpop.xlane.xlu0 %426
        %v428 = vadd.f32 %v377, %v378
        %429 = vadd.xlane.f32.xlu0 %v428
        %v430 = vpop.xlane.xlu0 %429
        %v431 = vadd.f32 %v379, %v380
        %432 = vadd.xlane.f32.xlu0 %v431
        %v433 = vpop.xlane.xlu0 %432
        %v434 = vadd.f32 %v381, %v382
        %435 = vadd.xlane.f32.xlu0 %v434
        %v436 = vpop.xlane.xlu0 %435
        %v437 = vadd.f32 %v383, %v384
        %438 = vadd.xlane.f32.xlu0 %v437
        %v439 = vpop.xlane.xlu0 %438
        %v440 = vadd.f32 %v385, %v386
        %441 = vadd.xlane.f32.xlu0 %v440
        %v442 = vpop.xlane.xlu0 %441
        %v443 = vadd.f32 %v387, %v388
        %444 = vadd.xlane.f32.xlu0 %v443
        %v445 = vpop.xlane.xlu0 %444
        %v446 = vadd.f32 %v389, %v390
        %447 = vadd.xlane.f32.xlu0 %v446
        %v448 = vpop.xlane.xlu0 %447
        %v449 = vadd.f32 %v391, %v392
        %450 = vadd.xlane.f32.xlu0 %v449
        %v451 = vpop.xlane.xlu0 %450
        %v452 = vadd.f32 %v393, %v394
        %453 = vadd.xlane.f32.xlu0 %v452
        %v454 = vpop.xlane.xlu0 %453
        %v455 = vadd.f32 %v395, %v396
        %456 = vadd.xlane.f32.xlu0 %v455
        %v457 = vpop.xlane.xlu0 %456
        %v458 = vadd.f32 %v397, %v398
        %459 = vadd.xlane.f32.xlu0 %v458
        %v460 = vpop.xlane.xlu0 %459
        %v461 = vadd.f32 %v399, %v400
        %462 = vadd.xlane.f32.xlu0 %v461
        %v463 = vpop.xlane.xlu0 %462
        %v464 = vadd.f32 %v401, %v402
        %465 = vadd.xlane.f32.xlu0 %v464
        %v466 = vpop.xlane.xlu0 %465
        %v467 = vadd.f32 %v403, %v404
        %468 = vadd.xlane.f32.xlu0 %v467
        %v469 = vpop.xlane.xlu0 %468
        %v470 = vadd.f32 %v405, %v406
        %471 = vadd.xlane.f32.xlu0 %v470
        %v472 = vpop.xlane.xlu0 %471
        %v473 = vadd.f32 %v407, %v408
        %474 = vadd.xlane.f32.xlu0 %v473
        %v475 = vpop.xlane.xlu0 %474
        %v476 = vadd.f32 %v409, %v410
        %477 = vadd.xlane.f32.xlu0 %v476
        %v478 = vpop.xlane.xlu0 %477
        %v479 = vadd.f32 %v411, %v412
        %480 = vadd.xlane.f32.xlu0 %v479
        %v481 = vpop.xlane.xlu0 %480
        %v482 = vadd.f32 %v413, %v414
        %483 = vadd.xlane.f32.xlu0 %v482
        %v484 = vpop.xlane.xlu0 %483
        %v485 = vadd.f32 %v415, %v416
        %486 = vadd.xlane.f32.xlu0 %v485
        %v487 = vpop.xlane.xlu0 %486
        %v488 = vadd.f32 %v417, %v418
        %489 = vadd.xlane.f32.xlu0 %v488
        %v490 = vpop.xlane.xlu0 %489
        %v491 = vmul.f32 %v371, %v371
        %v492 = vmul.f32 %v372, %v372
        %v493 = vmul.f32 %v373, %v373
        %v494 = vmul.f32 %v374, %v374
        %v495 = vmul.f32 %v375, %v375
        %v496 = vmul.f32 %v376, %v376
        %v497 = vmul.f32 %v377, %v377
        %v498 = vmul.f32 %v378, %v378
        %v499 = vmul.f32 %v379, %v379
        %v500 = vmul.f32 %v380, %v380
        %v501 = vmul.f32 %v381, %v381
        %v502 = vmul.f32 %v382, %v382
        %v503 = vmul.f32 %v383, %v383
        %v504 = vmul.f32 %v384, %v384
        %v505 = vmul.f32 %v385, %v385
        %v506 = vmul.f32 %v386, %v386
        %v507 = vmul.f32 %v387, %v387
        %v508 = vmul.f32 %v388, %v388
        %v509 = vmul.f32 %v389, %v389
        %v510 = vmul.f32 %v390, %v390
        %v511 = vmul.f32 %v391, %v391
        %v512 = vmul.f32 %v392, %v392
        %v513 = vmul.f32 %v393, %v393
        %v514 = vmul.f32 %v394, %v394
        %v515 = vmul.f32 %v395, %v395
        %v516 = vmul.f32 %v396, %v396
        %v517 = vmul.f32 %v397, %v397
        %v518 = vmul.f32 %v398, %v398
        %v519 = vmul.f32 %v399, %v399
        %v520 = vmul.f32 %v400, %v400
        %v521 = vmul.f32 %v401, %v401
        %v522 = vmul.f32 %v402, %v402
        %v523 = vmul.f32 %v403, %v403
        %v524 = vmul.f32 %v404, %v404
        %v525 = vmul.f32 %v405, %v405
        %v526 = vmul.f32 %v406, %v406
        %v527 = vmul.f32 %v407, %v407
        %v528 = vmul.f32 %v408, %v408
        %v529 = vmul.f32 %v409, %v409
        %v530 = vmul.f32 %v410, %v410
        %v531 = vmul.f32 %v411, %v411
        %v532 = vmul.f32 %v412, %v412
        %v533 = vmul.f32 %v413, %v413
        %v534 = vmul.f32 %v414, %v414
        %v535 = vmul.f32 %v415, %v415
        %v536 = vmul.f32 %v416, %v416
        %v537 = vmul.f32 %v417, %v417
        %v538 = vmul.f32 %v418, %v418
        %v539 = vadd.f32 %v491, %v492
        %540 = vadd.xlane.f32.xlu0 %v539
        %v541 = vpop.xlane.xlu0 %540
        %v542 = vadd.f32 %v493, %v494
        %543 = vadd.xlane.f32.xlu0 %v542
        %v544 = vpop.xlane.xlu0 %543
        %v545 = vadd.f32 %v495, %v496
        %546 = vadd.xlane.f32.xlu0 %v545
        %v547 = vpop.xlane.xlu0 %546
        %v548 = vadd.f32 %v497, %v498
        %549 = vadd.xlane.f32.xlu0 %v548
        %v550 = vpop.xlane.xlu0 %549
        %v551 = vadd.f32 %v499, %v500
        %552 = vadd.xlane.f32.xlu0 %v551
        %v553 = vpop.xlane.xlu0 %552
        %v554 = vadd.f32 %v501, %v502
        %555 = vadd.xlane.f32.xlu0 %v554
        %v556 = vpop.xlane.xlu0 %555
        %v557 = vadd.f32 %v503, %v504
        %558 = vadd.xlane.f32.xlu0 %v557
        %v559 = vpop.xlane.xlu0 %558
        %v560 = vadd.f32 %v505, %v506
        %561 = vadd.xlane.f32.xlu0 %v560
        %v562 = vpop.xlane.xlu0 %561
        %v563 = vadd.f32 %v507, %v508
        %564 = vadd.xlane.f32.xlu0 %v563
        %v565 = vpop.xlane.xlu0 %564
        %v566 = vadd.f32 %v509, %v510
        %567 = vadd.xlane.f32.xlu0 %v566
        %v568 = vpop.xlane.xlu0 %567
        %v569 = vadd.f32 %v511, %v512
        %570 = vadd.xlane.f32.xlu0 %v569
        %v571 = vpop.xlane.xlu0 %570
        %v572 = vadd.f32 %v513, %v514
        %573 = vadd.xlane.f32.xlu0 %v572
        %v574 = vpop.xlane.xlu0 %573
        %v575 = vadd.f32 %v515, %v516
        %576 = vadd.xlane.f32.xlu0 %v575
        %v577 = vpop.xlane.xlu0 %576
        %v578 = vadd.f32 %v517, %v518
        %579 = vadd.xlane.f32.xlu0 %v578
        %v580 = vpop.xlane.xlu0 %579
        %v581 = vadd.f32 %v519, %v520
        %582 = vadd.xlane.f32.xlu0 %v581
        %v583 = vpop.xlane.xlu0 %582
        %v584 = vadd.f32 %v521, %v522
        %585 = vadd.xlane.f32.xlu0 %v584
        %v586 = vpop.xlane.xlu0 %585
        %v587 = vadd.f32 %v523, %v524
        %588 = vadd.xlane.f32.xlu0 %v587
        %v589 = vpop.xlane.xlu0 %588
        %v590 = vadd.f32 %v525, %v526
        %591 = vadd.xlane.f32.xlu0 %v590
        %v592 = vpop.xlane.xlu0 %591
        %v593 = vadd.f32 %v527, %v528
        %594 = vadd.xlane.f32.xlu0 %v593
        %v595 = vpop.xlane.xlu0 %594
        %v596 = vadd.f32 %v529, %v530
        %597 = vadd.xlane.f32.xlu0 %v596
        %v598 = vpop.xlane.xlu0 %597
        %v599 = vadd.f32 %v531, %v532
        %600 = vadd.xlane.f32.xlu0 %v599
        %v601 = vpop.xlane.xlu0 %600
        %v602 = vadd.f32 %v533, %v534
        %603 = vadd.xlane.f32.xlu0 %v602
        %v604 = vpop.xlane.xlu0 %603
        %v605 = vadd.f32 %v535, %v536
        %606 = vadd.xlane.f32.xlu0 %v605
        %v607 = vpop.xlane.xlu0 %606
        %v608 = vadd.f32 %v537, %v538
        %609 = vadd.xlane.f32.xlu0 %v608
        %v610 = vpop.xlane.xlu0 %609
        %v611 = vmul.f32 %v421, 0.00390625
        %v612 = vmul.f32 %v424, 0.00390625
        %v613 = vmul.f32 %v427, 0.00390625
        %v614 = vmul.f32 %v430, 0.00390625
        %v615 = vmul.f32 %v433, 0.00390625
        %v616 = vmul.f32 %v436, 0.00390625
        %v617 = vmul.f32 %v439, 0.00390625
        %v618 = vmul.f32 %v442, 0.00390625
        %v619 = vmul.f32 %v445, 0.00390625
        %v620 = vmul.f32 %v448, 0.00390625
        %v621 = vmul.f32 %v451, 0.00390625
        %v622 = vmul.f32 %v454, 0.00390625
        %v623 = vmul.f32 %v457, 0.00390625
        %v624 = vmul.f32 %v460, 0.00390625
        %v625 = vmul.f32 %v463, 0.00390625
        %v626 = vmul.f32 %v466, 0.00390625
        %v627 = vmul.f32 %v469, 0.00390625
        %v628 = vmul.f32 %v472, 0.00390625
        %v629 = vmul.f32 %v475, 0.00390625
        %v630 = vmul.f32 %v478, 0.00390625
        %v631 = vmul.f32 %v481, 0.00390625
        %v632 = vmul.f32 %v484, 0.00390625
        %v633 = vmul.f32 %v487, 0.00390625
        %v634 = vmul.f32 %v490, 0.00390625
        %v635 = vmul.f32 %v541, 0.00390625
        %v636 = vmul.f32 %v544, 0.00390625
        %v637 = vmul.f32 %v547, 0.00390625
        %v638 = vmul.f32 %v550, 0.00390625
        %v639 = vmul.f32 %v553, 0.00390625
        %v640 = vmul.f32 %v556, 0.00390625
        %v641 = vmul.f32 %v559, 0.00390625
        %v642 = vmul.f32 %v562, 0.00390625
        %v643 = vmul.f32 %v565, 0.00390625
        %v644 = vmul.f32 %v568, 0.00390625
        %v645 = vmul.f32 %v571, 0.00390625
        %v646 = vmul.f32 %v574, 0.00390625
        %v647 = vmul.f32 %v577, 0.00390625
        %v648 = vmul.f32 %v580, 0.00390625
        %v649 = vmul.f32 %v583, 0.00390625
        %v650 = vmul.f32 %v586, 0.00390625
        %v651 = vmul.f32 %v589, 0.00390625
        %v652 = vmul.f32 %v592, 0.00390625
        %v653 = vmul.f32 %v595, 0.00390625
        %v654 = vmul.f32 %v598, 0.00390625
        %v655 = vmul.f32 %v601, 0.00390625
        %v656 = vmul.f32 %v604, 0.00390625
        %v657 = vmul.f32 %v607, 0.00390625
        %v658 = vmul.f32 %v610, 0.00390625
        %v659 = vmul.f32 %v611, %v611
        %v660 = vmul.f32 %v612, %v612
        %v661 = vmul.f32 %v613, %v613
        %v662 = vmul.f32 %v614, %v614
        %v663 = vmul.f32 %v615, %v615
        %v664 = vmul.f32 %v616, %v616
        %v665 = vmul.f32 %v617, %v617
        %v666 = vmul.f32 %v618, %v618
        %v667 = vmul.f32 %v619, %v619
        %v668 = vmul.f32 %v620, %v620
        %v669 = vmul.f32 %v621, %v621
        %v670 = vmul.f32 %v622, %v622
        %v671 = vmul.f32 %v623, %v623
        %v672 = vmul.f32 %v624, %v624
        %v673 = vmul.f32 %v625, %v625
        %v674 = vmul.f32 %v626, %v626
        %v675 = vmul.f32 %v627, %v627
        %v676 = vmul.f32 %v628, %v628
        %v677 = vmul.f32 %v629, %v629
        %v678 = vmul.f32 %v630, %v630
        %v679 = vmul.f32 %v631, %v631
        %v680 = vmul.f32 %v632, %v632
        %v681 = vmul.f32 %v633, %v633
        %v682 = vmul.f32 %v634, %v634
        %v683 = vsub.f32 %v635, %v659
        %v684 = vsub.f32 %v636, %v660
        %v685 = vsub.f32 %v637, %v661
        %v686 = vsub.f32 %v638, %v662
        %v687 = vsub.f32 %v639, %v663
        %v688 = vsub.f32 %v640, %v664
        %v689 = vsub.f32 %v641, %v665
        %v690 = vsub.f32 %v642, %v666
        %v691 = vsub.f32 %v643, %v667
        %v692 = vsub.f32 %v644, %v668
        %v693 = vsub.f32 %v645, %v669
        %v694 = vsub.f32 %v646, %v670
        %v695 = vsub.f32 %v647, %v671
        %v696 = vsub.f32 %v648, %v672
        %v697 = vsub.f32 %v649, %v673
        %v698 = vsub.f32 %v650, %v674
        %v699 = vsub.f32 %v651, %v675
        %v700 = vsub.f32 %v652, %v676
        %v701 = vsub.f32 %v653, %v677
        %v702 = vsub.f32 %v654, %v678
        %v703 = vsub.f32 %v655, %v679
        %v704 = vsub.f32 %v656, %v680
        %v705 = vsub.f32 %v657, %v681
        %v706 = vsub.f32 %v658, %v682
        %v707 = vsub.f32 %v371, %v611
        %v708 = vsub.f32 %v372, %v611
        %v709 = vsub.f32 %v373, %v612
        %v710 = vsub.f32 %v374, %v612
        %v711 = vsub.f32 %v375, %v613
        %v712 = vsub.f32 %v376, %v613
        %v713 = vsub.f32 %v377, %v614
        %v714 = vsub.f32 %v378, %v614
        %v715 = vsub.f32 %v379, %v615
        %v716 = vsub.f32 %v380, %v615
        %v717 = vsub.f32 %v381, %v616
        %v718 = vsub.f32 %v382, %v616
        %v719 = vsub.f32 %v383, %v617
        %v720 = vsub.f32 %v384, %v617
        %v721 = vsub.f32 %v385, %v618
        %v722 = vsub.f32 %v386, %v618
        %v723 = vsub.f32 %v387, %v619
        %v724 = vsub.f32 %v388, %v619
        %v725 = vsub.f32 %v389, %v620
        %v726 = vsub.f32 %v390, %v620
        %v727 = vsub.f32 %v391, %v621
        %v728 = vsub.f32 %v392, %v621
        %v729 = vsub.f32 %v393, %v622
        %v730 = vsub.f32 %v394, %v622
        %v731 = vsub.f32 %v395, %v623
        %v732 = vsub.f32 %v396, %v623
        %v733 = vsub.f32 %v397, %v624
        %v734 = vsub.f32 %v398, %v624
        %v735 = vsub.f32 %v399, %v625
        %v736 = vsub.f32 %v400, %v625
        %v737 = vsub.f32 %v401, %v626
        %v738 = vsub.f32 %v402, %v626
        %v739 = vsub.f32 %v403, %v627
        %v740 = vsub.f32 %v404, %v627
        %v741 = vsub.f32 %v405, %v628
        %v742 = vsub.f32 %v406, %v628
        %v743 = vsub.f32 %v407, %v629
        %v744 = vsub.f32 %v408, %v629
        %v745 = vsub.f32 %v409, %v630
        %v746 = vsub.f32 %v410, %v630
        %v747 = vsub.f32 %v411, %v631
        %v748 = vsub.f32 %v412, %v631
        %v749 = vsub.f32 %v413, %v632
        %v750 = vsub.f32 %v414, %v632
        %v751 = vsub.f32 %v415, %v633
        %v752 = vsub.f32 %v416, %v633
        %v753 = vsub.f32 %v417, %v634
        %v754 = vsub.f32 %v418, %v634
        %v755 = vadd.f32 %v683, 1e-12
        %v756 = vadd.f32 %v684, 1e-12
        %v757 = vadd.f32 %v685, 1e-12
        %v758 = vadd.f32 %v686, 1e-12
        %v759 = vadd.f32 %v687, 1e-12
        %v760 = vadd.f32 %v688, 1e-12
        %v761 = vadd.f32 %v689, 1e-12
        %v762 = vadd.f32 %v690, 1e-12
        %v763 = vadd.f32 %v691, 1e-12
        %v764 = vadd.f32 %v692, 1e-12
        %v765 = vadd.f32 %v693, 1e-12
        %v766 = vadd.f32 %v694, 1e-12
        %v767 = vadd.f32 %v695, 1e-12
        %v768 = vadd.f32 %v696, 1e-12
        %v769 = vadd.f32 %v697, 1e-12
        %v770 = vadd.f32 %v698, 1e-12
        %v771 = vadd.f32 %v699, 1e-12
        %v772 = vadd.f32 %v700, 1e-12
        %v773 = vadd.f32 %v701, 1e-12
        %v774 = vadd.f32 %v702, 1e-12
        %v775 = vadd.f32 %v703, 1e-12
        %v776 = vadd.f32 %v704, 1e-12
        %v777 = vadd.f32 %v705, 1e-12
        %v778 = vadd.f32 %v706, 1e-12
        %v779 = vrsqrt.pop %v755
        %v780 = vrsqrt.pop %v756
        %v781 = vrsqrt.pop %v757
        %v782 = vrsqrt.pop %v758
        %v783 = vrsqrt.pop %v759
        %v784 = vrsqrt.pop %v760
        %v785 = vrsqrt.pop %v761
        %v786 = vrsqrt.pop %v762
        %v787 = vrsqrt.pop %v763
        %v788 = vrsqrt.pop %v764
        %v789 = vrsqrt.pop %v765
        %v790 = vrsqrt.pop %v766
        %v791 = vrsqrt.pop %v767
        %v792 = vrsqrt.pop %v768
        %v793 = vrsqrt.pop %v769
        %v794 = vrsqrt.pop %v770
        %v795 = vrsqrt.pop %v771
        %v796 = vrsqrt.pop %v772
        %v797 = vrsqrt.pop %v773
        %v798 = vrsqrt.pop %v774
        %v799 = vrsqrt.pop %v775
        %v800 = vrsqrt.pop %v776
        %v801 = vrsqrt.pop %v777
        %v802 = vrsqrt.pop %v778
        %v803 = vmul.f32 %v707, %v779
        %v804 = vmul.f32 %v708, %v779
        %v805 = vmul.f32 %v709, %v780
        %v806 = vmul.f32 %v710, %v780
        %v807 = vmul.f32 %v711, %v781
        %v808 = vmul.f32 %v712, %v781
        %v809 = vmul.f32 %v713, %v782
        %v810 = vmul.f32 %v714, %v782
        %v811 = vmul.f32 %v715, %v783
        %v812 = vmul.f32 %v716, %v783
        %v813 = vmul.f32 %v717, %v784
        %v814 = vmul.f32 %v718, %v784
        %v815 = vmul.f32 %v719, %v785
        %v816 = vmul.f32 %v720, %v785
        %v817 = vmul.f32 %v721, %v786
        %v818 = vmul.f32 %v722, %v786
        %v819 = vmul.f32 %v723, %v787
        %v820 = vmul.f32 %v724, %v787
        %v821 = vmul.f32 %v725, %v788
        %v822 = vmul.f32 %v726, %v788
        %v823 = vmul.f32 %v727, %v789
        %v824 = vmul.f32 %v728, %v789
        %v825 = vmul.f32 %v729, %v790
        %v826 = vmul.f32 %v730, %v790
        %v827 = vmul.f32 %v731, %v791
        %v828 = vmul.f32 %v732, %v791
        %v829 = vmul.f32 %v733, %v792
        %v830 = vmul.f32 %v734, %v792
        %v831 = vmul.f32 %v735, %v793
        %v832 = vmul.f32 %v736, %v793
        %v833 = vmul.f32 %v737, %v794
        %v834 = vmul.f32 %v738, %v794
        %v835 = vmul.f32 %v739, %v795
        %v836 = vmul.f32 %v740, %v795
        %v837 = vmul.f32 %v741, %v796
        %v838 = vmul.f32 %v742, %v796
        %v839 = vmul.f32 %v743, %v797
        %v840 = vmul.f32 %v744, %v797
        %v841 = vmul.f32 %v745, %v798
        %v842 = vmul.f32 %v746, %v798
        %v843 = vmul.f32 %v747, %v799
        %v844 = vmul.f32 %v748, %v799
        %v845 = vmul.f32 %v749, %v800
        %v846 = vmul.f32 %v750, %v800
        %v847 = vmul.f32 %v751, %v801
        %v848 = vmul.f32 %v752, %v801
        %v849 = vmul.f32 %v753, %v802
        %v850 = vmul.f32 %v754, %v802
        %v851 = vpack.c.bf16 %v805, %v803
        %v852 = vpack.c.bf16 %v806, %v804
        %v853 = vpack.c.bf16 %v809, %v807
        %v854 = vpack.c.bf16 %v810, %v808
        %v855 = vpack.c.bf16 %v813, %v811
        %v856 = vpack.c.bf16 %v814, %v812
        %v857 = vpack.c.bf16 %v817, %v815
        %v858 = vpack.c.bf16 %v818, %v816
        %v859 = vpack.c.bf16 %v821, %v819
        %v860 = vpack.c.bf16 %v822, %v820
        %v861 = vpack.c.bf16 %v825, %v823
        %v862 = vpack.c.bf16 %v826, %v824
        %v863 = vpack.c.bf16 %v829, %v827
        %v864 = vpack.c.bf16 %v830, %v828
        %v865 = vpack.c.bf16 %v833, %v831
        %v866 = vpack.c.bf16 %v834, %v832
        %v867 = vpack.c.bf16 %v837, %v835
        %v868 = vpack.c.bf16 %v838, %v836
        %v869 = vpack.c.bf16 %v841, %v839
        %v870 = vpack.c.bf16 %v842, %v840
        %v871 = vpack.c.bf16 %v845, %v843
        %v872 = vpack.c.bf16 %v846, %v844
        %v873 = vpack.c.bf16 %v849, %v847
        %v874 = vpack.c.bf16 %v850, %v848
        %v875 = vld [vmem:[#allocation7] sm:$0xff]
        %v876 = vld [vmem:[#allocation7 + $0x8] sm:$0xff]
        %v877 = vld [vmem:[#allocation7 + $0x10] sm:$0xff]
        %v878 = vld [vmem:[#allocation7 + $0x18] sm:$0xff]
        %v879 = vld [vmem:[#allocation7 + $0x20] sm:$0xff]
        %v880 = vld [vmem:[#allocation7 + $0x28] sm:$0xff]
        %v881 = vld [vmem:[#allocation7 + $0x30] sm:$0xff]
        %v882 = vld [vmem:[#allocation7 + $0x38] sm:$0xff]
        %v883 = vld [vmem:[#allocation7 + $0x40] sm:$0xff]
        %v884 = vld [vmem:[#allocation7 + $0x48] sm:$0xff]
        %v885 = vld [vmem:[#allocation7 + $0x50] sm:$0xff]
        %v886 = vld [vmem:[#allocation7 + $0x58] sm:$0xff]
        %v887 = vld [vmem:[#allocation7 + $0x60] sm:$0xff]
        %v888 = vld [vmem:[#allocation7 + $0x68] sm:$0xff]
        %v889 = vld [vmem:[#allocation7 + $0x70] sm:$0xff]
        %v890 = vld [vmem:[#allocation7 + $0x78] sm:$0xff]
        %v891 = vld [vmem:[#allocation7 + $0x80] sm:$0xff]
        %v892 = vld [vmem:[#allocation7 + $0x88] sm:$0xff]
        %v893 = vld [vmem:[#allocation7 + $0x90] sm:$0xff]
        %v894 = vld [vmem:[#allocation7 + $0x98] sm:$0xff]
        %v895 = vld [vmem:[#allocation7 + $0xa0] sm:$0xff]
        %v896 = vld [vmem:[#allocation7 + $0xa8] sm:$0xff]
        %v897 = vld [vmem:[#allocation7 + $0xb0] sm:$0xff]
        %v898 = vld [vmem:[#allocation7 + $0xb8] sm:$0xff]
        %v899 = vld [vmem:[#allocation7 + $0xc0] sm:$0xff]
        %v900 = vld [vmem:[#allocation7 + $0xc8] sm:$0xff]
        %v901 = vld [vmem:[#allocation7 + $0xd0] sm:$0xff]
        %v902 = vld [vmem:[#allocation7 + $0xd8] sm:$0xff]
        %v903 = vld [vmem:[#allocation7 + $0xe0] sm:$0xff]
        %v904 = vld [vmem:[#allocation7 + $0xe8] sm:$0xff]
        %v905 = vld [vmem:[#allocation7 + $0xf0] sm:$0xff]
        %v906 = vld [vmem:[#allocation7 + $0xf8] sm:$0xff]
        %v907 = vld [vmem:[%s3] sm:$0x3]
        %v909 = vlaneseq
        %v910 = vshrl.u32 %v909, 7
        %v911 = vsub.s32 0, %v910
        %v912 = vrot.slane %v907, %v911
        %v913 = vlaneseq
        %v914 = vshrl.u32 %v913, 7
        %v915 = vsub.s32 1, %v914
        %v916 = vrot.slane %v907, %v915
        %v951 = vunpack.c.l.b16 %v875
        %v952 = vunpack.c.h.b16 %v875
        %v953 = vunpack.c.l.b16 %v876
        %v954 = vunpack.c.h.b16 %v876
        %v955 = vunpack.c.l.b16 %v877
        %v956 = vunpack.c.h.b16 %v877
        %v957 = vunpack.c.l.b16 %v878
        %v958 = vunpack.c.h.b16 %v878
        %v959 = vunpack.c.l.b16 %v879
        %v960 = vunpack.c.h.b16 %v879
        %v961 = vunpack.c.l.b16 %v880
        %v962 = vunpack.c.h.b16 %v880
        %v963 = vunpack.c.l.b16 %v881
        %v964 = vunpack.c.h.b16 %v881
        %v965 = vunpack.c.l.b16 %v882
        %v966 = vunpack.c.h.b16 %v882
        %v967 = vunpack.c.l.b16 %v883
        %v968 = vunpack.c.h.b16 %v883
        %v969 = vunpack.c.l.b16 %v884
        %v970 = vunpack.c.h.b16 %v884
        %v971 = vunpack.c.l.b16 %v885
        %v972 = vunpack.c.h.b16 %v885
        %v973 = vunpack.c.l.b16 %v886
        %v974 = vunpack.c.h.b16 %v886
        %v975 = vunpack.c.l.b16 %v887
        %v976 = vunpack.c.h.b16 %v887
        %v977 = vunpack.c.l.b16 %v888
        %v978 = vunpack.c.h.b16 %v888
        %v979 = vunpack.c.l.b16 %v889
        %v980 = vunpack.c.h.b16 %v889
        %v981 = vunpack.c.l.b16 %v890
        %v982 = vunpack.c.h.b16 %v890
        %v983 = vunpack.c.l.b16 %v891
        %v984 = vunpack.c.h.b16 %v891
        %v985 = vunpack.c.l.b16 %v892
        %v986 = vunpack.c.h.b16 %v892
        %v987 = vunpack.c.l.b16 %v893
        %v988 = vunpack.c.h.b16 %v893
        %v989 = vunpack.c.l.b16 %v894
        %v990 = vunpack.c.h.b16 %v894
        %v991 = vunpack.c.l.b16 %v895
        %v992 = vunpack.c.h.b16 %v895
        %v993 = vunpack.c.l.b16 %v896
        %v994 = vunpack.c.h.b16 %v896
        %v995 = vunpack.c.l.b16 %v897
        %v996 = vunpack.c.h.b16 %v897
        %v997 = vunpack.c.l.b16 %v898
        %v998 = vunpack.c.h.b16 %v898
        %v999 = vunpack.c.l.b16 %v899
        %v1000 = vunpack.c.h.b16 %v899
        %v1001 = vunpack.c.l.b16 %v900
        %v1002 = vunpack.c.h.b16 %v900
        %v1003 = vunpack.c.l.b16 %v901
        %v1004 = vunpack.c.h.b16 %v901
        %v1005 = vunpack.c.l.b16 %v902
        %v1006 = vunpack.c.h.b16 %v902
        %v1007 = vunpack.c.l.b16 %v903
        %v1008 = vunpack.c.h.b16 %v903
        %v1009 = vunpack.c.l.b16 %v904
        %v1010 = vunpack.c.h.b16 %v904
        %v1011 = vunpack.c.l.b16 %v905
        %v1012 = vunpack.c.h.b16 %v905
        %v1013 = vunpack.c.l.b16 %v906
        %v1014 = vunpack.c.h.b16 %v906
        %v1015 = vpack.c.b16 %v953, %v951
        %v1016 = vpack.c.b16 %v954, %v952
        %v1017 = vpack.c.b16 %v957, %v955
        %v1018 = vpack.c.b16 %v958, %v956
        %v1019 = vpack.c.b16 %v961, %v959
        %v1020 = vpack.c.b16 %v962, %v960
        %v1021 = vpack.c.b16 %v965, %v963
        %v1022 = vpack.c.b16 %v966, %v964
        %v1023 = vpack.c.b16 %v969, %v967
        %v1024 = vpack.c.b16 %v970, %v968
        %v1025 = vpack.c.b16 %v973, %v971
        %v1026 = vpack.c.b16 %v974, %v972
        %v1027 = vpack.c.b16 %v977, %v975
        %v1028 = vpack.c.b16 %v978, %v976
        %v1029 = vpack.c.b16 %v981, %v979
        %v1030 = vpack.c.b16 %v982, %v980
        %v1031 = vpack.c.b16 %v985, %v983
        %v1032 = vpack.c.b16 %v986, %v984
        %v1033 = vpack.c.b16 %v989, %v987
        %v1034 = vpack.c.b16 %v990, %v988
        %v1035 = vpack.c.b16 %v993, %v991
        %v1036 = vpack.c.b16 %v994, %v992
        %v1037 = vpack.c.b16 %v997, %v995
        %v1038 = vpack.c.b16 %v998, %v996
        %v1039 = vpack.c.b16 %v1001, %v999
        %v1040 = vpack.c.b16 %v1002, %v1000
        %v1041 = vpack.c.b16 %v1005, %v1003
        %v1042 = vpack.c.b16 %v1006, %v1004
        %v1043 = vpack.c.b16 %v1009, %v1007
        %v1044 = vpack.c.b16 %v1010, %v1008
        %v1045 = vpack.c.b16 %v1013, %v1011
        %v1046 = vpack.c.b16 %v1014, %v1012
        %1079 = vmatprep.subr.bf16.mxu0 %v1030
        %1080 = vmatpush1.bf16.msra.mxu0 %v1029
        %1081 = vmatprep.subr.bf16.mxu0 %v1028
        %1082 = vmatpush1.bf16.msra.mxu0 %v1027
        %1083 = vmatprep.subr.bf16.mxu0 %v1026
        %1084 = vmatpush1.bf16.msra.mxu0 %v1025
        %1085 = vmatprep.subr.bf16.mxu0 %v1024
        %1086 = vmatpush1.bf16.msra.mxu0 %v1023
        %1087 = vmatprep.subr.bf16.mxu0 %v1022
        %1088 = vmatpush1.bf16.msra.mxu0 %v1021
        %1089 = vmatprep.subr.bf16.mxu0 %v1020
        %1090 = vmatpush1.bf16.msra.mxu0 %v1019
        %1091 = vmatprep.subr.bf16.mxu0 %v1018
        %1092 = vmatpush1.bf16.msra.mxu0 %v1017
        %1093 = vmatprep.subr.bf16.mxu0 %v1016
        %1094 = vmatpush1.bf16.msra.mxu0 %v1015
        %1095 = vmatprep.subr.bf16.mxu0 %v1046
        %1096 = vmatpush2.bf16.msra.mxu0 %v1045
        %1097 = vmatprep.subr.bf16.mxu0 %v1044
        %1098 = vmatpush2.bf16.msra.mxu0 %v1043
        %1099 = vmatprep.subr.bf16.mxu0 %v1042
        %1100 = vmatpush2.bf16.msra.mxu0 %v1041
        %1101 = vmatprep.subr.bf16.mxu0 %v1040
        %1102 = vmatpush2.bf16.msra.mxu0 %v1039
        %1103 = vmatprep.subr.bf16.mxu0 %v1038
        %1104 = vmatpush2.bf16.msra.mxu0 %v1037
        %1105 = vmatprep.subr.bf16.mxu0 %v1036
        %1106 = vmatpush2.bf16.msra.mxu0 %v1035
        %1107 = vmatprep.subr.bf16.mxu0 %v1034
        %1108 = vmatpush2.bf16.msra.mxu0 %v1033
        %1109 = vmatprep.subr.bf16.mxu0 %v1032
        %1110 = vmatpush2.bf16.msra.mxu0 %v1031
        %1111 = vmatprep.mubr.bf16.mxu0 %v852
        %1112 = vmatmul.mubr.bf16.gmra.mxu0 %v851
        %v1113 = vpop.f32.mrf.mxu0
        %v1114 = vadd.f32 %v912, %v1113
        %v1115 = vpop.f32.mrf.mxu0
        %v1116 = vadd.f32 %v916, %v1115
        %v1117 = vpop.f32.mrf.mxu0
        %v1118 = vadd.f32 %v912, %v1117
        %v1119 = vpop.f32.mrf.mxu0
        %v1120 = vadd.f32 %v916, %v1119
        %1121 = vmatprep.mubr.bf16.mxu0 %v854
        %1122 = vmatmul.mubr.bf16.gmra.mxu0 %v853
        %v1123 = vpop.f32.mrf.mxu0
        %v1124 = vadd.f32 %v912, %v1123
        %v1125 = vpop.f32.mrf.mxu0
        %v1126 = vadd.f32 %v916, %v1125
        %v1127 = vpop.f32.mrf.mxu0
        %v1128 = vadd.f32 %v912, %v1127
        %v1129 = vpop.f32.mrf.mxu0
        %v1130 = vadd.f32 %v916, %v1129
        %1131 = vmatprep.mubr.bf16.mxu0 %v856
        %1132 = vmatmul.mubr.bf16.gmra.mxu0 %v855
        %v1133 = vpop.f32.mrf.mxu0
        %v1134 = vadd.f32 %v912, %v1133
        %v1135 = vpop.f32.mrf.mxu0
        %v1136 = vadd.f32 %v916, %v1135
        %v1137 = vpop.f32.mrf.mxu0
        %v1138 = vadd.f32 %v912, %v1137
        %v1139 = vpop.f32.mrf.mxu0
        %v1140 = vadd.f32 %v916, %v1139
        %1141 = vmatprep.mubr.bf16.mxu0 %v858
        %1142 = vmatmul.mubr.bf16.gmra.mxu0 %v857
        %v1143 = vpop.f32.mrf.mxu0
        %v1144 = vadd.f32 %v912, %v1143
        %v1145 = vpop.f32.mrf.mxu0
        %v1146 = vadd.f32 %v916, %v1145
        %v1147 = vpop.f32.mrf.mxu0
        %v1148 = vadd.f32 %v912, %v1147
        %v1149 = vpop.f32.mrf.mxu0
        %v1150 = vadd.f32 %v916, %v1149
        %1151 = vmatprep.mubr.bf16.mxu0 %v860
        %1152 = vmatmul.mubr.bf16.gmra.mxu0 %v859
        %v1153 = vpop.f32.mrf.mxu0
        %v1154 = vadd.f32 %v912, %v1153
        %v1155 = vpop.f32.mrf.mxu0
        %v1156 = vadd.f32 %v916, %v1155
        %v1157 = vpop.f32.mrf.mxu0
        %v1158 = vadd.f32 %v912, %v1157
        %v1159 = vpop.f32.mrf.mxu0
        %v1160 = vadd.f32 %v916, %v1159
        %1161 = vmatprep.mubr.bf16.mxu0 %v862
        %1162 = vmatmul.mubr.bf16.gmra.mxu0 %v861
        %v1163 = vpop.f32.mrf.mxu0
        %v1164 = vadd.f32 %v912, %v1163
        %v1165 = vpop.f32.mrf.mxu0
        %v1166 = vadd.f32 %v916, %v1165
        %v1167 = vpop.f32.mrf.mxu0
        %v1168 = vadd.f32 %v912, %v1167
        %v1169 = vpop.f32.mrf.mxu0
        %v1170 = vadd.f32 %v916, %v1169
        %1171 = vmatprep.mubr.bf16.mxu0 %v864
        %1172 = vmatmul.mubr.bf16.gmra.mxu0 %v863
        %v1173 = vpop.f32.mrf.mxu0
        %v1174 = vadd.f32 %v912, %v1173
        %v1175 = vpop.f32.mrf.mxu0
        %v1176 = vadd.f32 %v916, %v1175
        %v1177 = vpop.f32.mrf.mxu0
        %v1178 = vadd.f32 %v912, %v1177
        %v1179 = vpop.f32.mrf.mxu0
        %v1180 = vadd.f32 %v916, %v1179
        %1181 = vmatprep.mubr.bf16.mxu0 %v866
        %1182 = vmatmul.mubr.bf16.gmra.mxu0 %v865
        %v1183 = vpop.f32.mrf.mxu0
        %v1184 = vadd.f32 %v912, %v1183
        %v1185 = vpop.f32.mrf.mxu0
        %v1186 = vadd.f32 %v916, %v1185
        %v1187 = vpop.f32.mrf.mxu0
        %v1188 = vadd.f32 %v912, %v1187
        %v1189 = vpop.f32.mrf.mxu0
        %v1190 = vadd.f32 %v916, %v1189
        %1191 = vmatprep.mubr.bf16.mxu0 %v868
        %1192 = vmatmul.mubr.bf16.gmra.mxu0 %v867
        %v1193 = vpop.f32.mrf.mxu0
        %v1194 = vadd.f32 %v912, %v1193
        %v1195 = vpop.f32.mrf.mxu0
        %v1196 = vadd.f32 %v916, %v1195
        %v1197 = vpop.f32.mrf.mxu0
        %v1198 = vadd.f32 %v912, %v1197
        %v1199 = vpop.f32.mrf.mxu0
        %v1200 = vadd.f32 %v916, %v1199
        %1201 = vmatprep.mubr.bf16.mxu0 %v870
        %1202 = vmatmul.mubr.bf16.gmra.mxu0 %v869
        %v1203 = vpop.f32.mrf.mxu0
        %v1204 = vadd.f32 %v912, %v1203
        %v1205 = vpop.f32.mrf.mxu0
        %v1206 = vadd.f32 %v916, %v1205
        %v1207 = vpop.f32.mrf.mxu0
        %v1208 = vadd.f32 %v912, %v1207
        %v1209 = vpop.f32.mrf.mxu0
        %v1210 = vadd.f32 %v916, %v1209
        %1211 = vmatprep.mubr.bf16.mxu0 %v872
        %1212 = vmatmul.mubr.bf16.gmra.mxu0 %v871
        %v1213 = vpop.f32.mrf.mxu0
        %v1214 = vadd.f32 %v912, %v1213
        %v1215 = vpop.f32.mrf.mxu0
        %v1216 = vadd.f32 %v916, %v1215
        %v1217 = vpop.f32.mrf.mxu0
        %v1218 = vadd.f32 %v912, %v1217
        %v1219 = vpop.f32.mrf.mxu0
        %v1220 = vadd.f32 %v916, %v1219
        %1221 = vmatprep.mubr.bf16.mxu0 %v874
        %1222 = vmatmul.mubr.bf16.gmra.mxu0 %v873
        %v1223 = vpop.f32.mrf.mxu0
        %v1224 = vadd.f32 %v912, %v1223
        %v1225 = vpop.f32.mrf.mxu0
        %v1226 = vadd.f32 %v916, %v1225
        %v1227 = vpop.f32.mrf.mxu0
        %v1228 = vadd.f32 %v912, %v1227
        %v1229 = vpop.f32.mrf.mxu0
        %v1230 = vadd.f32 %v916, %v1229
        %1231 = vdwg.mxu0
        %1232 = vst [vmem:[%s271] sm:$0xff] %v1114
        %1233 = vst [vmem:[%s271 + $0x8] sm:$0xff] %v1116
        %1234 = vst [vmem:[%s271 + $0x10] sm:$0xff] %v1118
        %1235 = vst [vmem:[%s271 + $0x18] sm:$0xff] %v1120
        %1236 = vst [vmem:[%s271 + $0x20] sm:$0xff] %v1124
        %1237 = vst [vmem:[%s271 + $0x28] sm:$0xff] %v1126
        %1238 = vst [vmem:[%s271 + $0x30] sm:$0xff] %v1128
        %1239 = vst [vmem:[%s271 + $0x38] sm:$0xff] %v1130
        %1240 = vst [vmem:[%s271 + $0x40] sm:$0xff] %v1134
        %1241 = vst [vmem:[%s271 + $0x48] sm:$0xff] %v1136
        %1242 = vst [vmem:[%s271 + $0x50] sm:$0xff] %v1138
        %1243 = vst [vmem:[%s271 + $0x58] sm:$0xff] %v1140
        %1244 = vst [vmem:[%s271 + $0x60] sm:$0xff] %v1144
        %1245 = vst [vmem:[%s271 + $0x68] sm:$0xff] %v1146
        %1246 = vst [vmem:[%s271 + $0x70] sm:$0xff] %v1148
        %1247 = vst [vmem:[%s271 + $0x78] sm:$0xff] %v1150
        %1248 = vst [vmem:[%s271 + $0x80] sm:$0xff] %v1154
        %1249 = vst [vmem:[%s271 + $0x88] sm:$0xff] %v1156
        %1250 = vst [vmem:[%s271 + $0x90] sm:$0xff] %v1158
        %1251 = vst [vmem:[%s271 + $0x98] sm:$0xff] %v1160
        %1252 = vst [vmem:[%s271 + $0xa0] sm:$0xff] %v1164
        %1253 = vst [vmem:[%s271 + $0xa8] sm:$0xff] %v1166
        %1254 = vst [vmem:[%s271 + $0xb0] sm:$0xff] %v1168
        %1255 = vst [vmem:[%s271 + $0xb8] sm:$0xff] %v1170
        %1256 = vst [vmem:[%s271 + $0xc0] sm:$0xff] %v1174
        %1257 = vst [vmem:[%s271 + $0xc8] sm:$0xff] %v1176
        %1258 = vst [vmem:[%s271 + $0xd0] sm:$0xff] %v1178
        %1259 = vst [vmem:[%s271 + $0xd8] sm:$0xff] %v1180
        %1260 = vst [vmem:[%s271 + $0xe0] sm:$0xff] %v1184
        %1261 = vst [vmem:[%s271 + $0xe8] sm:$0xff] %v1186
        %1262 = vst [vmem:[%s271 + $0xf0] sm:$0xff] %v1188
        %1263 = vst [vmem:[%s271 + $0xf8] sm:$0xff] %v1190
        %1264 = vst [vmem:[%s271 + $0x100] sm:$0xff] %v1194
        %1265 = vst [vmem:[%s271 + $0x108] sm:$0xff] %v1196
        %1266 = vst [vmem:[%s271 + $0x110] sm:$0xff] %v1198
        %1267 = vst [vmem:[%s271 + $0x118] sm:$0xff] %v1200
        %1268 = vst [vmem:[%s271 + $0x120] sm:$0xff] %v1204
        %1269 = vst [vmem:[%s271 + $0x128] sm:$0xff] %v1206
        %1270 = vst [vmem:[%s271 + $0x130] sm:$0xff] %v1208
        %1271 = vst [vmem:[%s271 + $0x138] sm:$0xff] %v1210
        %1272 = vst [vmem:[%s271 + $0x140] sm:$0xff] %v1214
        %1273 = vst [vmem:[%s271 + $0x148] sm:$0xff] %v1216
        %1274 = vst [vmem:[%s271 + $0x150] sm:$0xff] %v1218
        %1275 = vst [vmem:[%s271 + $0x158] sm:$0xff] %v1220
        %1276 = vst [vmem:[%s271 + $0x160] sm:$0xff] %v1224
        %1277 = vst [vmem:[%s271 + $0x168] sm:$0xff] %v1226
        %1278 = vst [vmem:[%s271 + $0x170] sm:$0xff] %v1228
        %1279 = vst [vmem:[%s271 + $0x178] sm:$0xff] %v1230
        %s1280 = sand.u32 %s126, 1
        %s1281 = scalar_lea.sflag [#allocation4], %s1280
        %s1282 = sand.u32 %s126, 1
        %s1283 = smul.addr %s1282, 384
        %s1284 = scalar_lea.vmem [#allocation8], %s1283
        // Predicated region
        $region49: #{tpu_custom_call.1} parent=35 // pred_check
          %p1285 = pneg %p136
        $region50: #{tpu_custom_call.1} parent=35 // pred_check_branch
          %1287 = sbr.rel (%p1285) target = $region52
        $region51: #{tpu_custom_call.1} parent=35 // pred_region
          %s1288 = smul.u32 24, %s24
          %s1290 = ssub.s32 6144, 6144
          %1291 = vsyncadd %s1281, %s1290
          %s1292 = smul.addr %s1288, 2
          %s1293 = smul.addr %s1292, 128
          %s1294 = scalar_lea.hbm %s4, %s1293
          %s1295 = sshll.u32 %s1284, 4
          %s1296 = int_to_ptr.vmem [resolvable:$true] %s1295
          %1301 = dma.vmem_to_hbm [thread:$0]  %s1296, 6144, %s1294, %s1281, 256, 256, 16
        $region52: #{tpu_custom_call.1} parent=35 // pred_fallthru
          _
      $region36: #{tpu_custom_call.1} parent=5 // pred_fallthru
        _
      %p1302 = scmp.le.s32.totalorder 2, %s19
      // Predicated region
      $region53: #{tpu_custom_call.1} parent=5 // pred_check
        %p1303 = pneg %p1302
      $region54: #{tpu_custom_call.1} parent=5 // pred_check_branch
        %1305 = sbr.rel (%p1303) target = $region56
      $region55: #{tpu_custom_call.1} parent=5 // pred_region
        %s1306 = ssub.s32 %s19, 2
        // Predicated region
        $region57: #{tpu_custom_call.1} parent=55 // pred_check
          %p1307 = pneg %p142
        $region58: #{tpu_custom_call.1} parent=55 // pred_check_branch
          %1309 = sbr.rel (%p1307) target = $region60
        $region59: #{tpu_custom_call.1} parent=55 // pred_region
          %s1310 = sand.u32 %s127, 1
          %s1311 = scalar_lea.sflag [#allocation4], %s1310
          %s1312 = sand.u32 %s127, 1
          %s1313 = smul.addr %s1312, 384
          %s1314 = scalar_lea.vmem [#allocation8], %s1313
          %1315 = dma.done %s1311, 6144
        $region60: #{tpu_custom_call.1} parent=55 // pred_fallthru
          _
      $region56: #{tpu_custom_call.1} parent=5 // pred_fallthru
        _
    $region6: #{tpu_custom_call.1} parent=1 // loop_footer
      %s23 = sadd.s32 1, %s19
    $region7: #{tpu_custom_call.1} parent=1 // loop_footer_branch
      %18 = sbr.rel target = $region3
    $region8: #{tpu_custom_call.1} parent=1 // loop_exit
      _
    %1316 = vsyncpa [#allocation3], 1
    %s1317 = scalar_lea.sflag [#allocation3], 1
    %1318 = vsyncpa %s1317, 1
    %1319 = vsyncpa [#allocation6], 1
    %s1320 = scalar_lea.sflag [#allocation6], 1
    %1321 = vsyncpa %s1320, 1
    %1322 = vsyncpa [#allocation4], 1
    %s1323 = scalar_lea.sflag [#allocation4], 1
    %1324 = vsyncpa %s1323, 1

</llo_original>
